<compile_context>
chip_gen: v6e
topology: v6e:2x2x1
jax: 0.10.0
libtpu: 0.0.40
codegen_flags: <defaults>
</compile_context>

<pallas_src>
import functools

import jax
import jax.numpy as jnp
import numpy as np
from jax import lax
from jax.experimental import pallas as pl
from jax.experimental.pallas import tpu as pltpu


RB = 8  # sublane register-block: one (8, 128) vreg of grid cells


# ---------------------------------------------------------------------------
# Pallas kernel
# ---------------------------------------------------------------------------
def yolo_loss_kernel(m_ref, pred_ref, tbox_ref, tcls_ref, obj_ref, out_ref,
                     *, S, B, n_cls, TR, blocks_per_p):
    """Accumulates lane-dense (8,128) partial sums into a resident block.

    m_ref    : SMEM (1,) int32   true number of grid cells (for padding mask)
    pred_ref : (B*5+n_cls, TR, 128) channel-major predictions
    tbox_ref : (4, TR, 128)         target box (x, y, w, h)
    tcls_ref : (n_cls, TR, 128)     target one-hot / class targets
    obj_ref  : (1, TR, 128)         has_object (0/1)
    out_ref  : (5*RB, 128)          rows [l*8:(l+1)*8] hold partial sums for
               l = 0:class_sq, 1:noobj_conf_sq, 2:noobj_count, 3:reg_sq,
               4:contain_sq
    """
    p = pl.program_id(0)
    i = pl.program_id(1)
    inv_S = 1.0 / S
    m_true = m_ref[0]
    n_chunks = TR // RB
    block_row0 = (p * blocks_per_p + i) * TR

    # Zero this core's resident accumulator at the start of its reduction.
    @pl.when(i == 0)
    def _():
        out_ref[...] = jnp.zeros_like(out_ref)

    sub_iota = lax.broadcasted_iota(jnp.int32, (RB, 128), 0)
    lane_iota = lax.broadcasted_iota(jnp.int32, (RB, 128), 1)

    def chunk(j, accs):
        cls_acc, noobj_acc, cnt_acc, reg_acc, con_acc = accs
        r0 = pl.multiple_of(j * RB, RB)

        # Padding-validity mask: flattened cell index = row*128 + lane.
        row = block_row0 + j * RB + sub_iota
        valid = ((row * 128 + lane_iota) < m_true).astype(jnp.float32)

        raw_obj = obj_ref[0, pl.ds(r0, RB), :]          # (8,128) 0/1
        obj_mask = raw_obj > 0.5
        noobj_w = (1.0 - raw_obj) * valid

        # ---------------- class prediction loss ----------------
        cls_sq = jnp.zeros((RB, 128), jnp.float32)
        for c in range(n_cls):
            d = (pred_ref[B * 5 + c, pl.ds(r0, RB), :]
                 - tcls_ref[c, pl.ds(r0, RB), :])
            cls_sq = cls_sq + d * d
        cls_acc = cls_acc + jnp.where(obj_mask, cls_sq, 0.0)

        # ---------------- target box (xywh -> xyxy) ----------------
        tx = tbox_ref[0, pl.ds(r0, RB), :]
        ty = tbox_ref[1, pl.ds(r0, RB), :]
        tw = tbox_ref[2, pl.ds(r0, RB), :]
        th = tbox_ref[3, pl.ds(r0, RB), :]
        tx1 = tx * inv_S - 0.5 * tw
        tx2 = tx * inv_S + 0.5 * tw
        ty1 = ty * inv_S - 0.5 * th
        ty2 = ty * inv_S + 0.5 * th
        area_t = tw * th

        # ---------------- per-predictor IoU / best box ----------------
        conf_sq = None
        best_inter = best_union = None
        bx = by = bw = bh = bc = None
        for b in range(B):
            o = b * 5
            px = pred_ref[o + 0, pl.ds(r0, RB), :]
            py = pred_ref[o + 1, pl.ds(r0, RB), :]
            pw = pred_ref[o + 2, pl.ds(r0, RB), :]
            ph = pred_ref[o + 3, pl.ds(r0, RB), :]
            cf = pred_ref[o + 4, pl.ds(r0, RB), :]

            csq = cf * cf
            conf_sq = csq if conf_sq is None else conf_sq + csq

            px1 = px * inv_S - 0.5 * pw
            px2 = px * inv_S + 0.5 * pw
            py1 = py * inv_S - 0.5 * ph
            py2 = py * inv_S + 0.5 * ph
            wx = jnp.maximum(jnp.minimum(px2, tx2) - jnp.maximum(px1, tx1), 0.0)
            wy = jnp.maximum(jnp.minimum(py2, ty2) - jnp.maximum(py1, ty1), 0.0)
            inter = wx * wy
            union = pw * ph + area_t - inter

            if b == 0:
                best_inter, best_union = inter, union
                bx, by, bw, bh, bc = px, py, pw, ph, cf
            else:
                # Cross-multiplied "iou_b > best_iou": no divides, first max
                # wins on ties (like torch.argmax), no 0/0 NaN in padded lanes.
                better = inter * best_union > best_inter * union
                best_inter = jnp.where(better, inter, best_inter)
                best_union = jnp.where(better, union, best_union)
                bx = jnp.where(better, px, bx)
                by = jnp.where(better, py, by)
                bw = jnp.where(better, pw, bw)
                bh = jnp.where(better, ph, bh)
                bc = jnp.where(better, cf, bc)

        noobj_acc = noobj_acc + noobj_w * conf_sq
        cnt_acc = cnt_acc + noobj_w

        # Single guarded divide for the containing-confidence target.
        best_iou = jnp.where(best_union > 0.0, best_inter / best_union, 0.0)

        # sqrt of negative predicted w/h -> NaN, matching the reference.
        reg = ((bx - tx) ** 2 + (by - ty) ** 2 +
               (jnp.sqrt(bw) - jnp.sqrt(tw)) ** 2 +
               (jnp.sqrt(bh) - jnp.sqrt(th)) ** 2)
        reg_acc = reg_acc + jnp.where(obj_mask, reg, 0.0)
        con_acc = con_acc + jnp.where(obj_mask, (bc - best_iou) ** 2, 0.0)
        return cls_acc, noobj_acc, cnt_acc, reg_acc, con_acc

    zero = jnp.zeros((RB, 128), jnp.float32)
    accs = lax.fori_loop(0, n_chunks, chunk, (zero, zero, zero, zero, zero),
                         unroll=True)

    # One read-modify-write of the small resident output block per grid step.
    for r, acc in enumerate(accs):
        out_ref[r * RB:(r + 1) * RB, :] = out_ref[r * RB:(r + 1) * RB, :] + acc


# ---------------------------------------------------------------------------
# Wrapper
# ---------------------------------------------------------------------------
def yolo_loss(pred_tensor, target_boxes, target_cls, has_object_map, *,
              S, B, l_coord, l_noobj, rows_per_block=64, num_parallel=2):
    N = pred_tensor.shape[0]
    C = pred_tensor.shape[-1]
    n_cls = C - B * 5
    M = N * S * S

    # ---- tiling: 128 cells per lane-row, TR rows per grid step ----
    rows = -(-M // 128)
    TR = min(rows_per_block, -(-rows // RB) * RB)        # multiple of 8
    blocks_total = -(-rows // TR)
    P = num_parallel if blocks_total >= num_parallel else 1
    BPP = -(-blocks_total // P)                          # blocks per parallel half
    rows_padded = P * BPP * TR
    Mp = rows_padded * 128

    def to_channel_major(x, c):
        x = x.reshape(M, c).astype(jnp.float32)
        if Mp != M:
            x = jnp.pad(x, ((0, Mp - M), (0, 0)))
        # TODO(synk): this per-stream transpose is still an XLA HBM round trip;
        # producing channel-major activations upstream would remove it.
        return jnp.transpose(x.reshape(rows_padded, 128, c), (2, 0, 1))

    pred_cm = to_channel_major(pred_tensor, C)           # (C, rows_padded, 128)
    tbox_cm = to_channel_major(target_boxes, 4)
    tcls_cm = to_channel_major(target_cls, n_cls)
    obj_cm = to_channel_major(has_object_map, 1)

    kernel = functools.partial(yolo_loss_kernel, S=float(S), B=B, n_cls=n_cls,
                               TR=TR, blocks_per_p=BPP)

    in_map = lambda p, i, m: (0, p * BPP + i, 0)
    out = pl.pallas_call(
        kernel,
        out_shape=jax.ShapeDtypeStruct((P * 5 * RB, 128), jnp.float32),
        grid_spec=pltpu.PrefetchScalarGridSpec(
            num_scalar_prefetch=1,
            grid=(P, BPP),
            in_specs=[
                pl.BlockSpec((C, TR, 128), in_map),
                pl.BlockSpec((4, TR, 128), in_map),
                pl.BlockSpec((n_cls, TR, 128), in_map),
                pl.BlockSpec((1, TR, 128), in_map),
            ],
            out_specs=pl.BlockSpec((5 * RB, 128), lambda p, i, m: (p, 0)),
        ),
        compiler_params=pltpu.CompilerParams(
            dimension_semantics=("parallel", "arbitrary")),
    )(jnp.array([M], jnp.int32), pred_cm, tbox_cm, tcls_cm, obj_cm)

    sums = out.reshape(P, 5, RB, 128).sum(axis=(0, 2, 3))    # (5,)
    class_loss = sums[0]
    no_obj_loss = l_noobj * sums[1] / sums[2]                # sum_B mean(conf^2)
    reg_loss = l_coord * sums[3]
    contain_obj_loss = sums[4]
    total_loss = (class_loss + no_obj_loss + contain_obj_loss + reg_loss) / N
    return dict(total_loss=total_loss,
                reg_loss=reg_loss,
                containing_obj_loss=contain_obj_loss,
                no_obj_loss=no_obj_loss,
                cls_loss=class_loss)


# ---------------------------------------------------------------------------
# Pure numpy reference (mirrors the PyTorch module) for validation
# ---------------------------------------------------------------------------
def ref_yolo_loss(pred, tb, tc, obj, *, S, B, l_coord, l_noobj):
    pred = np.asarray(pred, np.float32)
    tb = np.asarray(tb, np.float32)
    tc = np.asarray(tc, np.float32)
    obj = np.asarray(obj, bool)
    N = pred.shape[0]

    pred_cls = pred[..., B * 5:]
    class_loss = (obj * ((pred_cls - tc) ** 2).sum(-1)).sum()

    boxes = [pred[..., i * 5:(i + 1) * 5] for i in range(B)]
    noobj = ~obj
    no_obj_loss = 0.0
    for bxs in boxes:
        conf = bxs[..., 4][noobj]
        no_obj_loss += np.mean(conf ** 2)
    no_obj_loss *= l_noobj

    pb = [bxs[obj] for bxs in boxes]
    tbo = tb[obj]

    def xyxy(b):
        x1 = b[:, 0] / S - 0.5 * b[:, 2]
        y1 = b[:, 1] / S - 0.5 * b[:, 3]
        x2 = b[:, 0] / S + 0.5 * b[:, 2]
        y2 = b[:, 1] / S + 0.5 * b[:, 3]
        return np.stack([x1, y1, x2, y2], 1)

    t_xyxy = xyxy(tbo)
    M = tbo.shape[0]
    ious = np.zeros((M, B), np.float32)
    for i in range(B):
        p_xyxy = xyxy(pb[i][:, :4])
        lt = np.maximum(p_xyxy[:, :2], t_xyxy[:, :2])
        rb = np.minimum(p_xyxy[:, 2:], t_xyxy[:, 2:])
        wh = np.clip(rb - lt, 0, None)
        inter = wh[:, 0] * wh[:, 1]
        a1 = (p_xyxy[:, 2] - p_xyxy[:, 0]) * (p_xyxy[:, 3] - p_xyxy[:, 1])
        a2 = (t_xyxy[:, 2] - t_xyxy[:, 0]) * (t_xyxy[:, 3] - t_xyxy[:, 1])
        ious[:, i] = inter / (a1 + a2 - inter)

    best_iou = ious.max(1)
    best_idx = ious.argmax(1)
    best_boxes = np.stack([pb[best_idx[i]][i] for i in range(M)], 0) \
        if M > 0 else np.zeros((0, 5), np.float32)

    bp = best_boxes[:, :4].copy()
    bt = tbo.copy()
    bp[:, 2:] = np.sqrt(bp[:, 2:])
    bt[:, 2:] = np.sqrt(bt[:, 2:])
    reg_loss = ((bp - bt) ** 2).sum() * l_coord
    contain = ((best_boxes[:, 4] - best_iou) ** 2).sum()
    total = (class_loss + no_obj_loss + contain + reg_loss) / N
    return dict(total_loss=total, reg_loss=reg_loss,
                containing_obj_loss=contain, no_obj_loss=no_obj_loss,
                cls_loss=class_loss)


# ---------------------------------------------------------------------------
if __name__ == "__main__":
    S, B = 8, 2
    l_coord, l_noobj = 5.0, 0.5
    n_cls = 20

    def make_inputs(key, N):
        k1, k2, k3, k4 = jax.random.split(key, 4)
        pred = jax.random.uniform(k1, (N, S, S, B * 5 + n_cls), dtype=jnp.float32)
        tb = jax.random.uniform(k2, (N, S, S, 4), dtype=jnp.float32)
        tc = jax.random.uniform(k3, (N, S, S, n_cls), dtype=jnp.float32)
        obj = jax.random.uniform(k4, (N, S, S)) < 0.3
        return pred, tb, tc, obj

    # --- small case: single block, single core ---
    pred, tb, tc, obj = make_inputs(jax.random.PRNGKey(0), 2)
    out = yolo_loss(pred, tb, tc, obj, S=S, B=B,
                    l_coord=l_coord, l_noobj=l_noobj)
    out = {k: jax.block_until_ready(v) for k, v in out.items()}
    ref = ref_yolo_loss(pred, tb, tc, obj, S=S, B=B,
                        l_coord=l_coord, l_noobj=l_noobj)
    for k in out:
        np.testing.assert_allclose(np.asarray(out[k]), ref[k],
                                   rtol=1e-4, atol=1e-5)

    # --- larger case: exercises the multi-block grid and the 2-way parallel
    # (dual-TensorCore) split of the accumulator. Looser tolerance because a
    # best-box argmax can legitimately flip on a near-tied IoU vs. the f32
    # numpy reference.
    pred2, tb2, tc2, obj2 = make_inputs(jax.random.PRNGKey(0), 130)
    out2 = yolo_loss(pred2, tb2, tc2, obj2, S=S, B=B,
                     l_coord=l_coord, l_noobj=l_noobj)
    out2 = {k: jax.block_until_ready(v) for k, v in out2.items()}
    ref2 = ref_yolo_loss(pred2, tb2, tc2, obj2, S=S, B=B,
                         l_coord=l_coord, l_noobj=l_noobj)
    for k in out2:
        np.testing.assert_allclose(np.asarray(out2[k]), ref2[k],
                                   rtol=5e-3, atol=1e-2)

    print("KERNEL_OK")
</pallas_src>

<mosaic_0001>
module attributes {stable_mosaic.version = 11 : i64} {
  func.func @yolo_loss_kernel(%arg0: i32, %arg1: i32, %arg2: memref<1xi32, #tpu.memory_space<smem>>, %arg3: memref<30x8x128xf32, #tpu.memory_space<vmem>>, %arg4: memref<4x8x128xf32, #tpu.memory_space<vmem>>, %arg5: memref<20x8x128xf32, #tpu.memory_space<vmem>>, %arg6: memref<1x8x128xf32, #tpu.memory_space<vmem>>, %arg7: memref<40x128xf32, #tpu.memory_space<vmem>>) attributes {dimension_semantics = [#tpu.dimension_semantics<parallel>, #tpu.dimension_semantics<arbitrary>], iteration_bounds = array<i64: 1, 1>, scalar_prefetch = 1 : i64, scratch_operands = 0 : i64, tpu.core_type = #tpu.core_type<tc>, window_params = [{transform_indices = @transform_0, window_bounds = array<i64: 30, 8, 128>}, {transform_indices = @transform_1, window_bounds = array<i64: 4, 8, 128>}, {transform_indices = @transform_2, window_bounds = array<i64: 20, 8, 128>}, {transform_indices = @transform_3, window_bounds = array<i64: 1, 8, 128>}, {transform_indices = @transform_4, window_bounds = array<i64: 40, 128>}]} {
    %c0 = arith.constant 0 : index
    %0 = memref.load %arg2[%c0] : memref<1xi32, #tpu.memory_space<smem>>
    %c1_i32 = arith.constant 1 : i32
    %1 = arith.muli %arg0, %c1_i32 : i32
    %2 = arith.addi %1, %arg1 : i32
    %c8_i32 = arith.constant 8 : i32
    %3 = arith.muli %2, %c8_i32 : i32
    %c0_i32 = arith.constant 0 : i32
    %4 = arith.cmpi eq, %arg1, %c0_i32 : i32
    %5 = arith.extui %4 : i1 to i32
    %c0_i32_0 = arith.constant 0 : i32
    %6 = arith.cmpi ne, %5, %c0_i32_0 : i32
    scf.if %6 {
      %cst_141 = arith.constant 0.000000e+00 : f32
      %405 = vector.broadcast %cst_141 : f32 to vector<40x128xf32>
      %c0_142 = arith.constant 0 : index
      %c0_143 = arith.constant 0 : index
      %406 = vector.load %arg7[%c0_142, %c0_143] : memref<40x128xf32, #tpu.memory_space<vmem>>, vector<40x128xf32>
      tpu.vector_store %arg7[%c0_142, %c0_143], %405 {strides = array<i32>} : memref<40x128xf32, #tpu.memory_space<vmem>>, vector<40x128xf32>,
    } else {
    }
    %7 = tpu.iota {dimensions = array<i32: 0>} : vector<8x128xi32>
    %8 = tpu.iota {dimensions = array<i32: 1>} : vector<8x128xi32>
    %cst = arith.constant 0.000000e+00 : f32
    %9 = vector.broadcast %cst : f32 to vector<8x128xf32>
    %c0_i32_1 = arith.constant 0 : i32
    %c8_i32_2 = arith.constant 8 : i32
    %10 = arith.muli %c0_i32_1, %c8_i32_2 : i32
    %11 = tpu.assume_multiple %10, 8 : i32
    %c8_i32_3 = arith.constant 8 : i32
    %12 = arith.muli %c0_i32_1, %c8_i32_3 : i32
    %13 = arith.addi %3, %12 : i32
    %14 = vector.broadcast %13 : i32 to vector<8x128xi32>
    %15 = arith.addi %14, %7 : vector<8x128xi32>
    %c128_i32 = arith.constant 128 : i32
    %16 = vector.broadcast %c128_i32 : i32 to vector<8x128xi32>
    %17 = arith.muli %15, %16 : vector<8x128xi32>
    %18 = arith.addi %17, %8 : vector<8x128xi32>
    %19 = vector.broadcast %0 : i32 to vector<8x128xi32>
    %20 = arith.cmpi slt, %18, %19 : vector<8x128xi32>
    %21 = arith.extui %20 : vector<8x128xi1> to vector<8x128xi32>
    %22 = arith.sitofp %21 : vector<8x128xi32> to vector<8x128xf32>
    %c0_4 = arith.constant 0 : index
    %23 = arith.index_cast %11 : i32 to index
    %c0_5 = arith.constant 0 : index
    %24 = vector.load %arg6[%c0_4, %23, %c0_5] : memref<1x8x128xf32, #tpu.memory_space<vmem>>, vector<1x8x128xf32>
    %25 = vector.shape_cast %24 : vector<1x8x128xf32> to vector<8x128xf32>
    %cst_6 = arith.constant 5.000000e-01 : f32
    %26 = vector.broadcast %cst_6 : f32 to vector<8x128xf32>
    %27 = arith.cmpf ogt, %25, %26 : vector<8x128xf32>
    %cst_7 = arith.constant 1.000000e+00 : f32
    %28 = vector.broadcast %cst_7 : f32 to vector<8x128xf32>
    %29 = arith.subf %28, %25 : vector<8x128xf32>
    %30 = arith.mulf %29, %22 : vector<8x128xf32>
    %cst_8 = arith.constant 0.000000e+00 : f32
    %31 = vector.broadcast %cst_8 : f32 to vector<8x128xf32>
    %c10 = arith.constant 10 : index
    %32 = arith.index_cast %11 : i32 to index
    %c0_9 = arith.constant 0 : index
    %33 = vector.load %arg3[%c10, %32, %c0_9] : memref<30x8x128xf32, #tpu.memory_space<vmem>>, vector<1x8x128xf32>
    %34 = vector.shape_cast %33 : vector<1x8x128xf32> to vector<8x128xf32>
    %c0_10 = arith.constant 0 : index
    %35 = arith.index_cast %11 : i32 to index
    %c0_11 = arith.constant 0 : index
    %36 = vector.load %arg5[%c0_10, %35, %c0_11] : memref<20x8x128xf32, #tpu.memory_space<vmem>>, vector<1x8x128xf32>
    %37 = vector.shape_cast %36 : vector<1x8x128xf32> to vector<8x128xf32>
    %38 = arith.subf %34, %37 : vector<8x128xf32>
    %39 = arith.mulf %38, %38 : vector<8x128xf32>
    %40 = arith.addf %31, %39 : vector<8x128xf32>
    %c11 = arith.constant 11 : index
    %41 = arith.index_cast %11 : i32 to index
    %c0_12 = arith.constant 0 : index
    %42 = vector.load %arg3[%c11, %41, %c0_12] : memref<30x8x128xf32, #tpu.memory_space<vmem>>, vector<1x8x128xf32>
    %43 = vector.shape_cast %42 : vector<1x8x128xf32> to vector<8x128xf32>
    %c1 = arith.constant 1 : index
    %44 = arith.index_cast %11 : i32 to index
    %c0_13 = arith.constant 0 : index
    %45 = vector.load %arg5[%c1, %44, %c0_13] : memref<20x8x128xf32, #tpu.memory_space<vmem>>, vector<1x8x128xf32>
    %46 = vector.shape_cast %45 : vector<1x8x128xf32> to vector<8x128xf32>
    %47 = arith.subf %43, %46 : vector<8x128xf32>
    %48 = arith.mulf %47, %47 : vector<8x128xf32>
    %49 = arith.addf %40, %48 : vector<8x128xf32>
    %c12 = arith.constant 12 : index
    %50 = arith.index_cast %11 : i32 to index
    %c0_14 = arith.constant 0 : index
    %51 = vector.load %arg3[%c12, %50, %c0_14] : memref<30x8x128xf32, #tpu.memory_space<vmem>>, vector<1x8x128xf32>
    %52 = vector.shape_cast %51 : vector<1x8x128xf32> to vector<8x128xf32>
    %c2 = arith.constant 2 : index
    %53 = arith.index_cast %11 : i32 to index
    %c0_15 = arith.constant 0 : index
    %54 = vector.load %arg5[%c2, %53, %c0_15] : memref<20x8x128xf32, #tpu.memory_space<vmem>>, vector<1x8x128xf32>
    %55 = vector.shape_cast %54 : vector<1x8x128xf32> to vector<8x128xf32>
    %56 = arith.subf %52, %55 : vector<8x128xf32>
    %57 = arith.mulf %56, %56 : vector<8x128xf32>
    %58 = arith.addf %49, %57 : vector<8x128xf32>
    %c13 = arith.constant 13 : index
    %59 = arith.index_cast %11 : i32 to index
    %c0_16 = arith.constant 0 : index
    %60 = vector.load %arg3[%c13, %59, %c0_16] : memref<30x8x128xf32, #tpu.memory_space<vmem>>, vector<1x8x128xf32>
    %61 = vector.shape_cast %60 : vector<1x8x128xf32> to vector<8x128xf32>
    %c3 = arith.constant 3 : index
    %62 = arith.index_cast %11 : i32 to index
    %c0_17 = arith.constant 0 : index
    %63 = vector.load %arg5[%c3, %62, %c0_17] : memref<20x8x128xf32, #tpu.memory_space<vmem>>, vector<1x8x128xf32>
    %64 = vector.shape_cast %63 : vector<1x8x128xf32> to vector<8x128xf32>
    %65 = arith.subf %61, %64 : vector<8x128xf32>
    %66 = arith.mulf %65, %65 : vector<8x128xf32>
    %67 = arith.addf %58, %66 : vector<8x128xf32>
    %c14 = arith.constant 14 : index
    %68 = arith.index_cast %11 : i32 to index
    %c0_18 = arith.constant 0 : index
    %69 = vector.load %arg3[%c14, %68, %c0_18] : memref<30x8x128xf32, #tpu.memory_space<vmem>>, vector<1x8x128xf32>
    %70 = vector.shape_cast %69 : vector<1x8x128xf32> to vector<8x128xf32>
    %c4 = arith.constant 4 : index
    %71 = arith.index_cast %11 : i32 to index
    %c0_19 = arith.constant 0 : index
    %72 = vector.load %arg5[%c4, %71, %c0_19] : memref<20x8x128xf32, #tpu.memory_space<vmem>>, vector<1x8x128xf32>
    %73 = vector.shape_cast %72 : vector<1x8x128xf32> to vector<8x128xf32>
    %74 = arith.subf %70, %73 : vector<8x128xf32>
    %75 = arith.mulf %74, %74 : vector<8x128xf32>
    %76 = arith.addf %67, %75 : vector<8x128xf32>
    %c15 = arith.constant 15 : index
    %77 = arith.index_cast %11 : i32 to index
    %c0_20 = arith.constant 0 : index
    %78 = vector.load %arg3[%c15, %77, %c0_20] : memref<30x8x128xf32, #tpu.memory_space<vmem>>, vector<1x8x128xf32>
    %79 = vector.shape_cast %78 : vector<1x8x128xf32> to vector<8x128xf32>
    %c5 = arith.constant 5 : index
    %80 = arith.index_cast %11 : i32 to index
    %c0_21 = arith.constant 0 : index
    %81 = vector.load %arg5[%c5, %80, %c0_21] : memref<20x8x128xf32, #tpu.memory_space<vmem>>, vector<1x8x128xf32>
    %82 = vector.shape_cast %81 : vector<1x8x128xf32> to vector<8x128xf32>
    %83 = arith.subf %79, %82 : vector<8x128xf32>
    %84 = arith.mulf %83, %83 : vector<8x128xf32>
    %85 = arith.addf %76, %84 : vector<8x128xf32>
    %c16 = arith.constant 16 : index
    %86 = arith.index_cast %11 : i32 to index
    %c0_22 = arith.constant 0 : index
    %87 = vector.load %arg3[%c16, %86, %c0_22] : memref<30x8x128xf32, #tpu.memory_space<vmem>>, vector<1x8x128xf32>
    %88 = vector.shape_cast %87 : vector<1x8x128xf32> to vector<8x128xf32>
    %c6 = arith.constant 6 : index
    %89 = arith.index_cast %11 : i32 to index
    %c0_23 = arith.constant 0 : index
    %90 = vector.load %arg5[%c6, %89, %c0_23] : memref<20x8x128xf32, #tpu.memory_space<vmem>>, vector<1x8x128xf32>
    %91 = vector.shape_cast %90 : vector<1x8x128xf32> to vector<8x128xf32>
    %92 = arith.subf %88, %91 : vector<8x128xf32>
    %93 = arith.mulf %92, %92 : vector<8x128xf32>
    %94 = arith.addf %85, %93 : vector<8x128xf32>
    %c17 = arith.constant 17 : index
    %95 = arith.index_cast %11 : i32 to index
    %c0_24 = arith.constant 0 : index
    %96 = vector.load %arg3[%c17, %95, %c0_24] : memref<30x8x128xf32, #tpu.memory_space<vmem>>, vector<1x8x128xf32>
    %97 = vector.shape_cast %96 : vector<1x8x128xf32> to vector<8x128xf32>
    %c7 = arith.constant 7 : index
    %98 = arith.index_cast %11 : i32 to index
    %c0_25 = arith.constant 0 : index
    %99 = vector.load %arg5[%c7, %98, %c0_25] : memref<20x8x128xf32, #tpu.memory_space<vmem>>, vector<1x8x128xf32>
    %100 = vector.shape_cast %99 : vector<1x8x128xf32> to vector<8x128xf32>
    %101 = arith.subf %97, %100 : vector<8x128xf32>
    %102 = arith.mulf %101, %101 : vector<8x128xf32>
    %103 = arith.addf %94, %102 : vector<8x128xf32>
    %c18 = arith.constant 18 : index
    %104 = arith.index_cast %11 : i32 to index
    %c0_26 = arith.constant 0 : index
    %105 = vector.load %arg3[%c18, %104, %c0_26] : memref<30x8x128xf32, #tpu.memory_space<vmem>>, vector<1x8x128xf32>
    %106 = vector.shape_cast %105 : vector<1x8x128xf32> to vector<8x128xf32>
    %c8 = arith.constant 8 : index
    %107 = arith.index_cast %11 : i32 to index
    %c0_27 = arith.constant 0 : index
    %108 = vector.load %arg5[%c8, %107, %c0_27] : memref<20x8x128xf32, #tpu.memory_space<vmem>>, vector<1x8x128xf32>
    %109 = vector.shape_cast %108 : vector<1x8x128xf32> to vector<8x128xf32>
    %110 = arith.subf %106, %109 : vector<8x128xf32>
    %111 = arith.mulf %110, %110 : vector<8x128xf32>
    %112 = arith.addf %103, %111 : vector<8x128xf32>
    %c19 = arith.constant 19 : index
    %113 = arith.index_cast %11 : i32 to index
    %c0_28 = arith.constant 0 : index
    %114 = vector.load %arg3[%c19, %113, %c0_28] : memref<30x8x128xf32, #tpu.memory_space<vmem>>, vector<1x8x128xf32>
    %115 = vector.shape_cast %114 : vector<1x8x128xf32> to vector<8x128xf32>
    %c9 = arith.constant 9 : index
    %116 = arith.index_cast %11 : i32 to index
    %c0_29 = arith.constant 0 : index
    %117 = vector.load %arg5[%c9, %116, %c0_29] : memref<20x8x128xf32, #tpu.memory_space<vmem>>, vector<1x8x128xf32>
    %118 = vector.shape_cast %117 : vector<1x8x128xf32> to vector<8x128xf32>
    %119 = arith.subf %115, %118 : vector<8x128xf32>
    %120 = arith.mulf %119, %119 : vector<8x128xf32>
    %121 = arith.addf %112, %120 : vector<8x128xf32>
    %c20 = arith.constant 20 : index
    %122 = arith.index_cast %11 : i32 to index
    %c0_30 = arith.constant 0 : index
    %123 = vector.load %arg3[%c20, %122, %c0_30] : memref<30x8x128xf32, #tpu.memory_space<vmem>>, vector<1x8x128xf32>
    %124 = vector.shape_cast %123 : vector<1x8x128xf32> to vector<8x128xf32>
    %c10_31 = arith.constant 10 : index
    %125 = arith.index_cast %11 : i32 to index
    %c0_32 = arith.constant 0 : index
    %126 = vector.load %arg5[%c10_31, %125, %c0_32] : memref<20x8x128xf32, #tpu.memory_space<vmem>>, vector<1x8x128xf32>
    %127 = vector.shape_cast %126 : vector<1x8x128xf32> to vector<8x128xf32>
    %128 = arith.subf %124, %127 : vector<8x128xf32>
    %129 = arith.mulf %128, %128 : vector<8x128xf32>
    %130 = arith.addf %121, %129 : vector<8x128xf32>
    %c21 = arith.constant 21 : index
    %131 = arith.index_cast %11 : i32 to index
    %c0_33 = arith.constant 0 : index
    %132 = vector.load %arg3[%c21, %131, %c0_33] : memref<30x8x128xf32, #tpu.memory_space<vmem>>, vector<1x8x128xf32>
    %133 = vector.shape_cast %132 : vector<1x8x128xf32> to vector<8x128xf32>
    %c11_34 = arith.constant 11 : index
    %134 = arith.index_cast %11 : i32 to index
    %c0_35 = arith.constant 0 : index
    %135 = vector.load %arg5[%c11_34, %134, %c0_35] : memref<20x8x128xf32, #tpu.memory_space<vmem>>, vector<1x8x128xf32>
    %136 = vector.shape_cast %135 : vector<1x8x128xf32> to vector<8x128xf32>
    %137 = arith.subf %133, %136 : vector<8x128xf32>
    %138 = arith.mulf %137, %137 : vector<8x128xf32>
    %139 = arith.addf %130, %138 : vector<8x128xf32>
    %c22 = arith.constant 22 : index
    %140 = arith.index_cast %11 : i32 to index
    %c0_36 = arith.constant 0 : index
    %141 = vector.load %arg3[%c22, %140, %c0_36] : memref<30x8x128xf32, #tpu.memory_space<vmem>>, vector<1x8x128xf32>
    %142 = vector.shape_cast %141 : vector<1x8x128xf32> to vector<8x128xf32>
    %c12_37 = arith.constant 12 : index
    %143 = arith.index_cast %11 : i32 to index
    %c0_38 = arith.constant 0 : index
    %144 = vector.load %arg5[%c12_37, %143, %c0_38] : memref<20x8x128xf32, #tpu.memory_space<vmem>>, vector<1x8x128xf32>
    %145 = vector.shape_cast %144 : vector<1x8x128xf32> to vector<8x128xf32>
    %146 = arith.subf %142, %145 : vector<8x128xf32>
    %147 = arith.mulf %146, %146 : vector<8x128xf32>
    %148 = arith.addf %139, %147 : vector<8x128xf32>
    %c23 = arith.constant 23 : index
    %149 = arith.index_cast %11 : i32 to index
    %c0_39 = arith.constant 0 : index
    %150 = vector.load %arg3[%c23, %149, %c0_39] : memref<30x8x128xf32, #tpu.memory_space<vmem>>, vector<1x8x128xf32>
    %151 = vector.shape_cast %150 : vector<1x8x128xf32> to vector<8x128xf32>
    %c13_40 = arith.constant 13 : index
    %152 = arith.index_cast %11 : i32 to index
    %c0_41 = arith.constant 0 : index
    %153 = vector.load %arg5[%c13_40, %152, %c0_41] : memref<20x8x128xf32, #tpu.memory_space<vmem>>, vector<1x8x128xf32>
    %154 = vector.shape_cast %153 : vector<1x8x128xf32> to vector<8x128xf32>
    %155 = arith.subf %151, %154 : vector<8x128xf32>
    %156 = arith.mulf %155, %155 : vector<8x128xf32>
    %157 = arith.addf %148, %156 : vector<8x128xf32>
    %c24 = arith.constant 24 : index
    %158 = arith.index_cast %11 : i32 to index
    %c0_42 = arith.constant 0 : index
    %159 = vector.load %arg3[%c24, %158, %c0_42] : memref<30x8x128xf32, #tpu.memory_space<vmem>>, vector<1x8x128xf32>
    %160 = vector.shape_cast %159 : vector<1x8x128xf32> to vector<8x128xf32>
    %c14_43 = arith.constant 14 : index
    %161 = arith.index_cast %11 : i32 to index
    %c0_44 = arith.constant 0 : index
    %162 = vector.load %arg5[%c14_43, %161, %c0_44] : memref<20x8x128xf32, #tpu.memory_space<vmem>>, vector<1x8x128xf32>
    %163 = vector.shape_cast %162 : vector<1x8x128xf32> to vector<8x128xf32>
    %164 = arith.subf %160, %163 : vector<8x128xf32>
    %165 = arith.mulf %164, %164 : vector<8x128xf32>
    %166 = arith.addf %157, %165 : vector<8x128xf32>
    %c25 = arith.constant 25 : index
    %167 = arith.index_cast %11 : i32 to index
    %c0_45 = arith.constant 0 : index
    %168 = vector.load %arg3[%c25, %167, %c0_45] : memref<30x8x128xf32, #tpu.memory_space<vmem>>, vector<1x8x128xf32>
    %169 = vector.shape_cast %168 : vector<1x8x128xf32> to vector<8x128xf32>
    %c15_46 = arith.constant 15 : index
    %170 = arith.index_cast %11 : i32 to index
    %c0_47 = arith.constant 0 : index
    %171 = vector.load %arg5[%c15_46, %170, %c0_47] : memref<20x8x128xf32, #tpu.memory_space<vmem>>, vector<1x8x128xf32>
    %172 = vector.shape_cast %171 : vector<1x8x128xf32> to vector<8x128xf32>
    %173 = arith.subf %169, %172 : vector<8x128xf32>
    %174 = arith.mulf %173, %173 : vector<8x128xf32>
    %175 = arith.addf %166, %174 : vector<8x128xf32>
    %c26 = arith.constant 26 : index
    %176 = arith.index_cast %11 : i32 to index
    %c0_48 = arith.constant 0 : index
    %177 = vector.load %arg3[%c26, %176, %c0_48] : memref<30x8x128xf32, #tpu.memory_space<vmem>>, vector<1x8x128xf32>
    %178 = vector.shape_cast %177 : vector<1x8x128xf32> to vector<8x128xf32>
    %c16_49 = arith.constant 16 : index
    %179 = arith.index_cast %11 : i32 to index
    %c0_50 = arith.constant 0 : index
    %180 = vector.load %arg5[%c16_49, %179, %c0_50] : memref<20x8x128xf32, #tpu.memory_space<vmem>>, vector<1x8x128xf32>
    %181 = vector.shape_cast %180 : vector<1x8x128xf32> to vector<8x128xf32>
    %182 = arith.subf %178, %181 : vector<8x128xf32>
    %183 = arith.mulf %182, %182 : vector<8x128xf32>
    %184 = arith.addf %175, %183 : vector<8x128xf32>
    %c27 = arith.constant 27 : index
    %185 = arith.index_cast %11 : i32 to index
    %c0_51 = arith.constant 0 : index
    %186 = vector.load %arg3[%c27, %185, %c0_51] : memref<30x8x128xf32, #tpu.memory_space<vmem>>, vector<1x8x128xf32>
    %187 = vector.shape_cast %186 : vector<1x8x128xf32> to vector<8x128xf32>
    %c17_52 = arith.constant 17 : index
    %188 = arith.index_cast %11 : i32 to index
    %c0_53 = arith.constant 0 : index
    %189 = vector.load %arg5[%c17_52, %188, %c0_53] : memref<20x8x128xf32, #tpu.memory_space<vmem>>, vector<1x8x128xf32>
    %190 = vector.shape_cast %189 : vector<1x8x128xf32> to vector<8x128xf32>
    %191 = arith.subf %187, %190 : vector<8x128xf32>
    %192 = arith.mulf %191, %191 : vector<8x128xf32>
    %193 = arith.addf %184, %192 : vector<8x128xf32>
    %c28 = arith.constant 28 : index
    %194 = arith.index_cast %11 : i32 to index
    %c0_54 = arith.constant 0 : index
    %195 = vector.load %arg3[%c28, %194, %c0_54] : memref<30x8x128xf32, #tpu.memory_space<vmem>>, vector<1x8x128xf32>
    %196 = vector.shape_cast %195 : vector<1x8x128xf32> to vector<8x128xf32>
    %c18_55 = arith.constant 18 : index
    %197 = arith.index_cast %11 : i32 to index
    %c0_56 = arith.constant 0 : index
    %198 = vector.load %arg5[%c18_55, %197, %c0_56] : memref<20x8x128xf32, #tpu.memory_space<vmem>>, vector<1x8x128xf32>
    %199 = vector.shape_cast %198 : vector<1x8x128xf32> to vector<8x128xf32>
    %200 = arith.subf %196, %199 : vector<8x128xf32>
    %201 = arith.mulf %200, %200 : vector<8x128xf32>
    %202 = arith.addf %193, %201 : vector<8x128xf32>
    %c29 = arith.constant 29 : index
    %203 = arith.index_cast %11 : i32 to index
    %c0_57 = arith.constant 0 : index
    %204 = vector.load %arg3[%c29, %203, %c0_57] : memref<30x8x128xf32, #tpu.memory_space<vmem>>, vector<1x8x128xf32>
    %205 = vector.shape_cast %204 : vector<1x8x128xf32> to vector<8x128xf32>
    %c19_58 = arith.constant 19 : index
    %206 = arith.index_cast %11 : i32 to index
    %c0_59 = arith.constant 0 : index
    %207 = vector.load %arg5[%c19_58, %206, %c0_59] : memref<20x8x128xf32, #tpu.memory_space<vmem>>, vector<1x8x128xf32>
    %208 = vector.shape_cast %207 : vector<1x8x128xf32> to vector<8x128xf32>
    %209 = arith.subf %205, %208 : vector<8x128xf32>
    %210 = arith.mulf %209, %209 : vector<8x128xf32>
    %211 = arith.addf %202, %210 : vector<8x128xf32>
    %cst_60 = arith.constant 0.000000e+00 : f32
    %212 = vector.broadcast %cst_60 : f32 to vector<8x128xf32>
    %213 = arith.select %27, %211, %212 : vector<8x128xi1>, vector<8x128xf32>
    %214 = arith.addf %9, %213 : vector<8x128xf32>
    %c0_61 = arith.constant 0 : index
    %215 = arith.index_cast %11 : i32 to index
    %c0_62 = arith.constant 0 : index
    %216 = vector.load %arg4[%c0_61, %215, %c0_62] : memref<4x8x128xf32, #tpu.memory_space<vmem>>, vector<1x8x128xf32>
    %217 = vector.shape_cast %216 : vector<1x8x128xf32> to vector<8x128xf32>
    %c1_63 = arith.constant 1 : index
    %218 = arith.index_cast %11 : i32 to index
    %c0_64 = arith.constant 0 : index
    %219 = vector.load %arg4[%c1_63, %218, %c0_64] : memref<4x8x128xf32, #tpu.memory_space<vmem>>, vector<1x8x128xf32>
    %220 = vector.shape_cast %219 : vector<1x8x128xf32> to vector<8x128xf32>
    %c2_65 = arith.constant 2 : index
    %221 = arith.index_cast %11 : i32 to index
    %c0_66 = arith.constant 0 : index
    %222 = vector.load %arg4[%c2_65, %221, %c0_66] : memref<4x8x128xf32, #tpu.memory_space<vmem>>, vector<1x8x128xf32>
    %223 = vector.shape_cast %222 : vector<1x8x128xf32> to vector<8x128xf32>
    %c3_67 = arith.constant 3 : index
    %224 = arith.index_cast %11 : i32 to index
    %c0_68 = arith.constant 0 : index
    %225 = vector.load %arg4[%c3_67, %224, %c0_68] : memref<4x8x128xf32, #tpu.memory_space<vmem>>, vector<1x8x128xf32>
    %226 = vector.shape_cast %225 : vector<1x8x128xf32> to vector<8x128xf32>
    %cst_69 = arith.constant 1.250000e-01 : f32
    %227 = vector.broadcast %cst_69 : f32 to vector<8x128xf32>
    %228 = arith.mulf %217, %227 : vector<8x128xf32>
    %cst_70 = arith.constant 5.000000e-01 : f32
    %229 = vector.broadcast %cst_70 : f32 to vector<8x128xf32>
    %230 = arith.mulf %229, %223 : vector<8x128xf32>
    %231 = arith.subf %228, %230 : vector<8x128xf32>
    %cst_71 = arith.constant 1.250000e-01 : f32
    %232 = vector.broadcast %cst_71 : f32 to vector<8x128xf32>
    %233 = arith.mulf %217, %232 : vector<8x128xf32>
    %cst_72 = arith.constant 5.000000e-01 : f32
    %234 = vector.broadcast %cst_72 : f32 to vector<8x128xf32>
    %235 = arith.mulf %234, %223 : vector<8x128xf32>
    %236 = arith.addf %233, %235 : vector<8x128xf32>
    %cst_73 = arith.constant 1.250000e-01 : f32
    %237 = vector.broadcast %cst_73 : f32 to vector<8x128xf32>
    %238 = arith.mulf %220, %237 : vector<8x128xf32>
    %cst_74 = arith.constant 5.000000e-01 : f32
    %239 = vector.broadcast %cst_74 : f32 to vector<8x128xf32>
    %240 = arith.mulf %239, %226 : vector<8x128xf32>
    %241 = arith.subf %238, %240 : vector<8x128xf32>
    %cst_75 = arith.constant 1.250000e-01 : f32
    %242 = vector.broadcast %cst_75 : f32 to vector<8x128xf32>
    %243 = arith.mulf %220, %242 : vector<8x128xf32>
    %cst_76 = arith.constant 5.000000e-01 : f32
    %244 = vector.broadcast %cst_76 : f32 to vector<8x128xf32>
    %245 = arith.mulf %244, %226 : vector<8x128xf32>
    %246 = arith.addf %243, %245 : vector<8x128xf32>
    %247 = arith.mulf %223, %226 : vector<8x128xf32>
    %c0_77 = arith.constant 0 : index
    %248 = arith.index_cast %11 : i32 to index
    %c0_78 = arith.constant 0 : index
    %249 = vector.load %arg3[%c0_77, %248, %c0_78] : memref<30x8x128xf32, #tpu.memory_space<vmem>>, vector<1x8x128xf32>
    %250 = vector.shape_cast %249 : vector<1x8x128xf32> to vector<8x128xf32>
    %c1_79 = arith.constant 1 : index
    %251 = arith.index_cast %11 : i32 to index
    %c0_80 = arith.constant 0 : index
    %252 = vector.load %arg3[%c1_79, %251, %c0_80] : memref<30x8x128xf32, #tpu.memory_space<vmem>>, vector<1x8x128xf32>
    %253 = vector.shape_cast %252 : vector<1x8x128xf32> to vector<8x128xf32>
    %c2_81 = arith.constant 2 : index
    %254 = arith.index_cast %11 : i32 to index
    %c0_82 = arith.constant 0 : index
    %255 = vector.load %arg3[%c2_81, %254, %c0_82] : memref<30x8x128xf32, #tpu.memory_space<vmem>>, vector<1x8x128xf32>
    %256 = vector.shape_cast %255 : vector<1x8x128xf32> to vector<8x128xf32>
    %c3_83 = arith.constant 3 : index
    %257 = arith.index_cast %11 : i32 to index
    %c0_84 = arith.constant 0 : index
    %258 = vector.load %arg3[%c3_83, %257, %c0_84] : memref<30x8x128xf32, #tpu.memory_space<vmem>>, vector<1x8x128xf32>
    %259 = vector.shape_cast %258 : vector<1x8x128xf32> to vector<8x128xf32>
    %c4_85 = arith.constant 4 : index
    %260 = arith.index_cast %11 : i32 to index
    %c0_86 = arith.constant 0 : index
    %261 = vector.load %arg3[%c4_85, %260, %c0_86] : memref<30x8x128xf32, #tpu.memory_space<vmem>>, vector<1x8x128xf32>
    %262 = vector.shape_cast %261 : vector<1x8x128xf32> to vector<8x128xf32>
    %263 = arith.mulf %262, %262 : vector<8x128xf32>
    %cst_87 = arith.constant 1.250000e-01 : f32
    %264 = vector.broadcast %cst_87 : f32 to vector<8x128xf32>
    %265 = arith.mulf %250, %264 : vector<8x128xf32>
    %cst_88 = arith.constant 5.000000e-01 : f32
    %266 = vector.broadcast %cst_88 : f32 to vector<8x128xf32>
    %267 = arith.mulf %266, %256 : vector<8x128xf32>
    %268 = arith.subf %265, %267 : vector<8x128xf32>
    %cst_89 = arith.constant 1.250000e-01 : f32
    %269 = vector.broadcast %cst_89 : f32 to vector<8x128xf32>
    %270 = arith.mulf %250, %269 : vector<8x128xf32>
    %cst_90 = arith.constant 5.000000e-01 : f32
    %271 = vector.broadcast %cst_90 : f32 to vector<8x128xf32>
    %272 = arith.mulf %271, %256 : vector<8x128xf32>
    %273 = arith.addf %270, %272 : vector<8x128xf32>
    %cst_91 = arith.constant 1.250000e-01 : f32
    %274 = vector.broadcast %cst_91 : f32 to vector<8x128xf32>
    %275 = arith.mulf %253, %274 : vector<8x128xf32>
    %cst_92 = arith.constant 5.000000e-01 : f32
    %276 = vector.broadcast %cst_92 : f32 to vector<8x128xf32>
    %277 = arith.mulf %276, %259 : vector<8x128xf32>
    %278 = arith.subf %275, %277 : vector<8x128xf32>
    %cst_93 = arith.constant 1.250000e-01 : f32
    %279 = vector.broadcast %cst_93 : f32 to vector<8x128xf32>
    %280 = arith.mulf %253, %279 : vector<8x128xf32>
    %cst_94 = arith.constant 5.000000e-01 : f32
    %281 = vector.broadcast %cst_94 : f32 to vector<8x128xf32>
    %282 = arith.mulf %281, %259 : vector<8x128xf32>
    %283 = arith.addf %280, %282 : vector<8x128xf32>
    %284 = arith.minimumf %273, %236 : vector<8x128xf32>
    %285 = arith.maximumf %268, %231 : vector<8x128xf32>
    %286 = arith.subf %284, %285 : vector<8x128xf32>
    %cst_95 = arith.constant 0.000000e+00 : f32
    %287 = vector.broadcast %cst_95 : f32 to vector<8x128xf32>
    %288 = arith.maximumf %286, %287 : vector<8x128xf32>
    %289 = arith.minimumf %283, %246 : vector<8x128xf32>
    %290 = arith.maximumf %278, %241 : vector<8x128xf32>
    %291 = arith.subf %289, %290 : vector<8x128xf32>
    %cst_96 = arith.constant 0.000000e+00 : f32
    %292 = vector.broadcast %cst_96 : f32 to vector<8x128xf32>
    %293 = arith.maximumf %291, %292 : vector<8x128xf32>
    %294 = arith.mulf %288, %293 : vector<8x128xf32>
    %295 = arith.mulf %256, %259 : vector<8x128xf32>
    %296 = arith.addf %295, %247 : vector<8x128xf32>
    %297 = arith.subf %296, %294 : vector<8x128xf32>
    %c5_97 = arith.constant 5 : index
    %298 = arith.index_cast %11 : i32 to index
    %c0_98 = arith.constant 0 : index
    %299 = vector.load %arg3[%c5_97, %298, %c0_98] : memref<30x8x128xf32, #tpu.memory_space<vmem>>, vector<1x8x128xf32>
    %300 = vector.shape_cast %299 : vector<1x8x128xf32> to vector<8x128xf32>
    %c6_99 = arith.constant 6 : index
    %301 = arith.index_cast %11 : i32 to index
    %c0_100 = arith.constant 0 : index
    %302 = vector.load %arg3[%c6_99, %301, %c0_100] : memref<30x8x128xf32, #tpu.memory_space<vmem>>, vector<1x8x128xf32>
    %303 = vector.shape_cast %302 : vector<1x8x128xf32> to vector<8x128xf32>
    %c7_101 = arith.constant 7 : index
    %304 = arith.index_cast %11 : i32 to index
    %c0_102 = arith.constant 0 : index
    %305 = vector.load %arg3[%c7_101, %304, %c0_102] : memref<30x8x128xf32, #tpu.memory_space<vmem>>, vector<1x8x128xf32>
    %306 = vector.shape_cast %305 : vector<1x8x128xf32> to vector<8x128xf32>
    %c8_103 = arith.constant 8 : index
    %307 = arith.index_cast %11 : i32 to index
    %c0_104 = arith.constant 0 : index
    %308 = vector.load %arg3[%c8_103, %307, %c0_104] : memref<30x8x128xf32, #tpu.memory_space<vmem>>, vector<1x8x128xf32>
    %309 = vector.shape_cast %308 : vector<1x8x128xf32> to vector<8x128xf32>
    %c9_105 = arith.constant 9 : index
    %310 = arith.index_cast %11 : i32 to index
    %c0_106 = arith.constant 0 : index
    %311 = vector.load %arg3[%c9_105, %310, %c0_106] : memref<30x8x128xf32, #tpu.memory_space<vmem>>, vector<1x8x128xf32>
    %312 = vector.shape_cast %311 : vector<1x8x128xf32> to vector<8x128xf32>
    %313 = arith.mulf %312, %312 : vector<8x128xf32>
    %314 = arith.addf %263, %313 : vector<8x128xf32>
    %cst_107 = arith.constant 1.250000e-01 : f32
    %315 = vector.broadcast %cst_107 : f32 to vector<8x128xf32>
    %316 = arith.mulf %300, %315 : vector<8x128xf32>
    %cst_108 = arith.constant 5.000000e-01 : f32
    %317 = vector.broadcast %cst_108 : f32 to vector<8x128xf32>
    %318 = arith.mulf %317, %306 : vector<8x128xf32>
    %319 = arith.subf %316, %318 : vector<8x128xf32>
    %cst_109 = arith.constant 1.250000e-01 : f32
    %320 = vector.broadcast %cst_109 : f32 to vector<8x128xf32>
    %321 = arith.mulf %300, %320 : vector<8x128xf32>
    %cst_110 = arith.constant 5.000000e-01 : f32
    %322 = vector.broadcast %cst_110 : f32 to vector<8x128xf32>
    %323 = arith.mulf %322, %306 : vector<8x128xf32>
    %324 = arith.addf %321, %323 : vector<8x128xf32>
    %cst_111 = arith.constant 1.250000e-01 : f32
    %325 = vector.broadcast %cst_111 : f32 to vector<8x128xf32>
    %326 = arith.mulf %303, %325 : vector<8x128xf32>
    %cst_112 = arith.constant 5.000000e-01 : f32
    %327 = vector.broadcast %cst_112 : f32 to vector<8x128xf32>
    %328 = arith.mulf %327, %309 : vector<8x128xf32>
    %329 = arith.subf %326, %328 : vector<8x128xf32>
    %cst_113 = arith.constant 1.250000e-01 : f32
    %330 = vector.broadcast %cst_113 : f32 to vector<8x128xf32>
    %331 = arith.mulf %303, %330 : vector<8x128xf32>
    %cst_114 = arith.constant 5.000000e-01 : f32
    %332 = vector.broadcast %cst_114 : f32 to vector<8x128xf32>
    %333 = arith.mulf %332, %309 : vector<8x128xf32>
    %334 = arith.addf %331, %333 : vector<8x128xf32>
    %335 = arith.minimumf %324, %236 : vector<8x128xf32>
    %336 = arith.maximumf %319, %231 : vector<8x128xf32>
    %337 = arith.subf %335, %336 : vector<8x128xf32>
    %cst_115 = arith.constant 0.000000e+00 : f32
    %338 = vector.broadcast %cst_115 : f32 to vector<8x128xf32>
    %339 = arith.maximumf %337, %338 : vector<8x128xf32>
    %340 = arith.minimumf %334, %246 : vector<8x128xf32>
    %341 = arith.maximumf %329, %241 : vector<8x128xf32>
    %342 = arith.subf %340, %341 : vector<8x128xf32>
    %cst_116 = arith.constant 0.000000e+00 : f32
    %343 = vector.broadcast %cst_116 : f32 to vector<8x128xf32>
    %344 = arith.maximumf %342, %343 : vector<8x128xf32>
    %345 = arith.mulf %339, %344 : vector<8x128xf32>
    %346 = arith.mulf %306, %309 : vector<8x128xf32>
    %347 = arith.addf %346, %247 : vector<8x128xf32>
    %348 = arith.subf %347, %345 : vector<8x128xf32>
    %349 = arith.mulf %345, %297 : vector<8x128xf32>
    %350 = arith.mulf %294, %348 : vector<8x128xf32>
    %351 = arith.cmpf ogt, %349, %350 : vector<8x128xf32>
    %352 = arith.select %351, %345, %294 : vector<8x128xi1>, vector<8x128xf32>
    %353 = arith.select %351, %348, %297 : vector<8x128xi1>, vector<8x128xf32>
    %354 = arith.select %351, %300, %250 : vector<8x128xi1>, vector<8x128xf32>
    %355 = arith.select %351, %303, %253 : vector<8x128xi1>, vector<8x128xf32>
    %356 = arith.select %351, %306, %256 : vector<8x128xi1>, vector<8x128xf32>
    %357 = arith.select %351, %309, %259 : vector<8x128xi1>, vector<8x128xf32>
    %358 = arith.select %351, %312, %262 : vector<8x128xi1>, vector<8x128xf32>
    %359 = arith.mulf %30, %314 : vector<8x128xf32>
    %360 = arith.addf %9, %359 : vector<8x128xf32>
    %361 = arith.addf %9, %30 : vector<8x128xf32>
    %cst_117 = arith.constant 0.000000e+00 : f32
    %362 = vector.broadcast %cst_117 : f32 to vector<8x128xf32>
    %363 = arith.cmpf ogt, %353, %362 : vector<8x128xf32>
    %364 = arith.divf %352, %353 : vector<8x128xf32>
    %cst_118 = arith.constant 0.000000e+00 : f32
    %365 = vector.broadcast %cst_118 : f32 to vector<8x128xf32>
    %366 = arith.select %363, %364, %365 : vector<8x128xi1>, vector<8x128xf32>
    %367 = arith.subf %354, %217 : vector<8x128xf32>
    %368 = arith.mulf %367, %367 : vector<8x128xf32>
    %369 = arith.subf %355, %220 : vector<8x128xf32>
    %370 = arith.mulf %369, %369 : vector<8x128xf32>
    %371 = arith.addf %368, %370 : vector<8x128xf32>
    %372 = math.sqrt %356 : vector<8x128xf32>
    %373 = math.sqrt %223 : vector<8x128xf32>
    %374 = arith.subf %372, %373 : vector<8x128xf32>
    %375 = arith.mulf %374, %374 : vector<8x128xf32>
    %376 = arith.addf %371, %375 : vector<8x128xf32>
    %377 = math.sqrt %357 : vector<8x128xf32>
    %378 = math.sqrt %226 : vector<8x128xf32>
    %379 = arith.subf %377, %378 : vector<8x128xf32>
    %380 = arith.mulf %379, %379 : vector<8x128xf32>
    %381 = arith.addf %376, %380 : vector<8x128xf32>
    %cst_119 = arith.constant 0.000000e+00 : f32
    %382 = vector.broadcast %cst_119 : f32 to vector<8x128xf32>
    %383 = arith.select %27, %381, %382 : vector<8x128xi1>, vector<8x128xf32>
    %384 = arith.addf %9, %383 : vector<8x128xf32>
    %385 = arith.subf %358, %366 : vector<8x128xf32>
    %386 = arith.mulf %385, %385 : vector<8x128xf32>
    %cst_120 = arith.constant 0.000000e+00 : f32
    %387 = vector.broadcast %cst_120 : f32 to vector<8x128xf32>
    %388 = arith.select %27, %386, %387 : vector<8x128xi1>, vector<8x128xf32>
    %389 = arith.addf %9, %388 : vector<8x128xf32>
    %c1_i32_121 = arith.constant 1 : i32
    %c0_122 = arith.constant 0 : index
    %c0_123 = arith.constant 0 : index
    %390 = vector.load %arg7[%c0_122, %c0_123] : memref<40x128xf32, #tpu.memory_space<vmem>>, vector<8x128xf32>
    %391 = arith.addf %390, %214 : vector<8x128xf32>
    %c0_124 = arith.constant 0 : index
    %c0_125 = arith.constant 0 : index
    %392 = vector.load %arg7[%c0_124, %c0_125] : memref<40x128xf32, #tpu.memory_space<vmem>>, vector<8x128xf32>
    tpu.vector_store %arg7[%c0_124, %c0_125], %391 {strides = array<i32>} : memref<40x128xf32, #tpu.memory_space<vmem>>, vector<8x128xf32>,
    %c8_126 = arith.constant 8 : index
    %c0_127 = arith.constant 0 : index
    %393 = vector.load %arg7[%c8_126, %c0_127] : memref<40x128xf32, #tpu.memory_space<vmem>>, vector<8x128xf32>
    %394 = arith.addf %393, %360 : vector<8x128xf32>
    %c8_128 = arith.constant 8 : index
    %c0_129 = arith.constant 0 : index
    %395 = vector.load %arg7[%c8_128, %c0_129] : memref<40x128xf32, #tpu.memory_space<vmem>>, vector<8x128xf32>
    tpu.vector_store %arg7[%c8_128, %c0_129], %394 {strides = array<i32>} : memref<40x128xf32, #tpu.memory_space<vmem>>, vector<8x128xf32>,
    %c16_130 = arith.constant 16 : index
    %c0_131 = arith.constant 0 : index
    %396 = vector.load %arg7[%c16_130, %c0_131] : memref<40x128xf32, #tpu.memory_space<vmem>>, vector<8x128xf32>
    %397 = arith.addf %396, %361 : vector<8x128xf32>
    %c16_132 = arith.constant 16 : index
    %c0_133 = arith.constant 0 : index
    %398 = vector.load %arg7[%c16_132, %c0_133] : memref<40x128xf32, #tpu.memory_space<vmem>>, vector<8x128xf32>
    tpu.vector_store %arg7[%c16_132, %c0_133], %397 {strides = array<i32>} : memref<40x128xf32, #tpu.memory_space<vmem>>, vector<8x128xf32>,
    %c24_134 = arith.constant 24 : index
    %c0_135 = arith.constant 0 : index
    %399 = vector.load %arg7[%c24_134, %c0_135] : memref<40x128xf32, #tpu.memory_space<vmem>>, vector<8x128xf32>
    %400 = arith.addf %399, %384 : vector<8x128xf32>
    %c24_136 = arith.constant 24 : index
    %c0_137 = arith.constant 0 : index
    %401 = vector.load %arg7[%c24_136, %c0_137] : memref<40x128xf32, #tpu.memory_space<vmem>>, vector<8x128xf32>
    tpu.vector_store %arg7[%c24_136, %c0_137], %400 {strides = array<i32>} : memref<40x128xf32, #tpu.memory_space<vmem>>, vector<8x128xf32>,
    %c32 = arith.constant 32 : index
    %c0_138 = arith.constant 0 : index
    %402 = vector.load %arg7[%c32, %c0_138] : memref<40x128xf32, #tpu.memory_space<vmem>>, vector<8x128xf32>
    %403 = arith.addf %402, %389 : vector<8x128xf32>
    %c32_139 = arith.constant 32 : index
    %c0_140 = arith.constant 0 : index
    %404 = vector.load %arg7[%c32_139, %c0_140] : memref<40x128xf32, #tpu.memory_space<vmem>>, vector<8x128xf32>
    tpu.vector_store %arg7[%c32_139, %c0_140], %403 {strides = array<i32>} : memref<40x128xf32, #tpu.memory_space<vmem>>, vector<8x128xf32>,
    return
  }
  func.func @transform_0(%arg0: i32, %arg1: i32, %arg2: memref<1xi32, #tpu.memory_space<smem>>) -> (i32, i32, i32) {
    %c1_i32 = arith.constant 1 : i32
    %0 = arith.muli %arg0, %c1_i32 : i32
    %1 = arith.addi %0, %arg1 : i32
    %c0_i32 = arith.constant 0 : i32
    %c0_i32_0 = arith.constant 0 : i32
    %c0_i32_1 = arith.constant 0 : i32
    return %c0_i32, %1, %c0_i32_0 : i32, i32, i32
  }
  func.func @transform_1(%arg0: i32, %arg1: i32, %arg2: memref<1xi32, #tpu.memory_space<smem>>) -> (i32, i32, i32) {
    %c1_i32 = arith.constant 1 : i32
    %0 = arith.muli %arg0, %c1_i32 : i32
    %1 = arith.addi %0, %arg1 : i32
    %c0_i32 = arith.constant 0 : i32
    %c0_i32_0 = arith.constant 0 : i32
    %c0_i32_1 = arith.constant 0 : i32
    return %c0_i32, %1, %c0_i32_0 : i32, i32, i32
  }
  func.func @transform_2(%arg0: i32, %arg1: i32, %arg2: memref<1xi32, #tpu.memory_space<smem>>) -> (i32, i32, i32) {
    %c1_i32 = arith.constant 1 : i32
    %0 = arith.muli %arg0, %c1_i32 : i32
    %1 = arith.addi %0, %arg1 : i32
    %c0_i32 = arith.constant 0 : i32
    %c0_i32_0 = arith.constant 0 : i32
    %c0_i32_1 = arith.constant 0 : i32
    return %c0_i32, %1, %c0_i32_0 : i32, i32, i32
  }
  func.func @transform_3(%arg0: i32, %arg1: i32, %arg2: memref<1xi32, #tpu.memory_space<smem>>) -> (i32, i32, i32) {
    %c1_i32 = arith.constant 1 : i32
    %0 = arith.muli %arg0, %c1_i32 : i32
    %1 = arith.addi %0, %arg1 : i32
    %c0_i32 = arith.constant 0 : i32
    %c0_i32_0 = arith.constant 0 : i32
    %c0_i32_1 = arith.constant 0 : i32
    return %c0_i32, %1, %c0_i32_0 : i32, i32, i32
  }
  func.func @transform_4(%arg0: i32, %arg1: i32, %arg2: memref<1xi32, #tpu.memory_space<smem>>) -> (i32, i32) {
    %c0_i32 = arith.constant 0 : i32
    %c0_i32_0 = arith.constant 0 : i32
    return %arg0, %c0_i32 : i32, i32
  }
}

</mosaic_0001>

<llo_original>
// kernel: tpu_custom_call.1
$region0: #{tpu_custom_call.1}
  #allocation0 [shape = 'u32[]', space=smem, size = 0x4, offset = 0x4, fixed_abs, tag = 'smem constant byte address 0x4 - core index']
  #allocation1 [shape = 'u32[144,128]{1,0:T(1,128)}', space=vmem, size = 0x12000, scoped, tag = 'internal scratch']
  #allocation2 [shape = 's32[1]{0}', space=sflag, size = 0x4, scoped, tag = 'scoped memory for tpu_custom_call.1']
  #allocation3 [shape = 's32[1]{0:T(128)S(6)}', space=smem, size = 0x200, scoped, tag = 'prefetched SMEM operand 0']
  %s0 = inlined_call_operand.<no memory space> [shape: s32[1], index: 0, kind: input, shape index: {}]
  %s1 = inlined_call_operand.hbm [shape: f32[30,8,128], index: 1, kind: input, shape index: {}]
  %s2 = inlined_call_operand.hbm [shape: f32[4,8,128], index: 2, kind: input, shape index: {}]
  %s3 = inlined_call_operand.hbm [shape: f32[20,8,128], index: 3, kind: input, shape index: {}]
  %s4 = inlined_call_operand.hbm [shape: f32[1,8,128], index: 4, kind: input, shape index: {}]
  %s5 = inlined_call_operand.hbm [shape: f32[40,128], index: 5, kind: output, shape index: {}]
  %s6 = sld [smem:[#allocation0]]
  $region46: #{tpu_custom_call.1} parent=0
    _
  %s8 = ssub.s32 1, %s6
  %s9 = scalar_select 0, %s8, %s6
  %10 = sst [smem:[#allocation3]] %s0
  $region1: #{tpu_custom_call.1} parent=0
    #allocation4 [shape = 'u8[122880]{0}', space=vmem, size = 0x1e000, scoped, tag = 'input window, operand 1, single buffered']
    #allocation5 [shape = 's32[1]{0}', space=sflag, size = 0x4, scoped, tag = 'scoped memory for tpu_custom_call.1']
    #allocation6 [shape = 's32[1]{0}', space=sflag, size = 0x4, scoped, tag = 'scoped memory for tpu_custom_call.1']
    #allocation7 [shape = 'u8[16384]{0}', space=vmem, size = 0x4000, scoped, tag = 'input window, operand 2, single buffered']
    #allocation8 [shape = 's32[1]{0}', space=sflag, size = 0x4, scoped, tag = 'scoped memory for tpu_custom_call.1']
    #allocation9 [shape = 'u8[81920]{0}', space=vmem, size = 0x14000, scoped, tag = 'input window, operand 3, single buffered']
    #allocation10 [shape = 'u8[4096]{0}', space=vmem, size = 0x1000, scoped, tag = 'input window, operand 4, single buffered']
    #allocation11 [shape = 's32[1]{0}', space=sflag, size = 0x4, scoped, tag = 'scoped memory for tpu_custom_call.1']
    #allocation12 [shape = 'u8[20480]{0}', space=vmem, size = 0x5000, scoped, tag = 'output window, operand 0, single buffered']
    %11 = vsyncpa [#allocation5], 0
    %12 = vsyncpa [#allocation8], 0
    %13 = vsyncpa [#allocation11], 0
    %14 = vsyncpa [#allocation6], 0
    // Predicated region
    $region2: #{tpu_custom_call.1} parent=1 // pred_check
      _
    $region3: #{tpu_custom_call.1} parent=1 // pred_check_branch
      %16 = sbr.rel (0) target = $region5
    $region4: #{tpu_custom_call.1} parent=1 // pred_region
      %s17 = sadd.s32 0, 0
      %s19 = ssub.s32 3840, 3840
      %20 = vsyncadd [#allocation5], %s19
      %s21 = smul.addr %s17, 128
      %s22 = scalar_lea.hbm %s1, %s21
      %s23 = sshll.u32 [#allocation4], 4
      %s24 = int_to_ptr.vmem [resolvable:$true] %s23
      %29 = dma.hbm_to_vmem [thread:$0]  %s22, 3840, %s24, [#allocation5], 128, 128, 8
    $region5: #{tpu_custom_call.1} parent=1 // pred_fallthru
      _
    // Predicated region
    $region6: #{tpu_custom_call.1} parent=1 // pred_check
      _
    $region7: #{tpu_custom_call.1} parent=1 // pred_check_branch
      %31 = sbr.rel (0) target = $region9
    $region8: #{tpu_custom_call.1} parent=1 // pred_region
      %s32 = sadd.s32 0, 0
      %s34 = ssub.s32 512, 512
      %35 = vsyncadd [#allocation8], %s34
      %s36 = smul.addr %s32, 128
      %s37 = scalar_lea.hbm %s2, %s36
      %s38 = sshll.u32 [#allocation7], 4
      %s39 = int_to_ptr.vmem [resolvable:$true] %s38
      %44 = dma.hbm_to_vmem [thread:$0]  %s37, 512, %s39, [#allocation8], 128, 128, 8
    $region9: #{tpu_custom_call.1} parent=1 // pred_fallthru
      _
    // Predicated region
    $region10: #{tpu_custom_call.1} parent=1 // pred_check
      _
    $region11: #{tpu_custom_call.1} parent=1 // pred_check_branch
      %46 = sbr.rel (0) target = $region13
    $region12: #{tpu_custom_call.1} parent=1 // pred_region
      %s47 = sadd.s32 0, 0
      %s49 = ssub.s32 2560, 2560
      %50 = vsyncadd [#allocation8], %s49
      %s51 = smul.addr %s47, 128
      %s52 = scalar_lea.hbm %s3, %s51
      %s53 = sshll.u32 [#allocation9], 4
      %s54 = int_to_ptr.vmem [resolvable:$true] %s53
      %59 = dma.hbm_to_vmem [thread:$0]  %s52, 2560, %s54, [#allocation8], 128, 128, 8
    $region13: #{tpu_custom_call.1} parent=1 // pred_fallthru
      _
    // Predicated region
    $region14: #{tpu_custom_call.1} parent=1 // pred_check
      _
    $region15: #{tpu_custom_call.1} parent=1 // pred_check_branch
      %61 = sbr.rel (0) target = $region17
    $region16: #{tpu_custom_call.1} parent=1 // pred_region
      %s62 = sadd.s32 0, 0
      %s64 = ssub.s32 128, 128
      %65 = vsyncadd [#allocation11], %s64
      %s66 = smul.addr %s62, 128
      %s67 = scalar_lea.hbm %s4, %s66
      %s69 = sshll.u32 [#allocation10], 4
      %s70 = int_to_ptr.vmem [resolvable:$true] %s69
      %72 = dma.hbm_to_vmem [thread:$0]  %s67, 128, %s70, [#allocation11]
    $region17: #{tpu_custom_call.1} parent=1 // pred_fallthru
      _
    // Predicated region
    $region18: #{tpu_custom_call.1} parent=1 // pred_check
      _
    $region19: #{tpu_custom_call.1} parent=1 // pred_check_branch
      %74 = sbr.rel (0) target = $region21
    $region20: #{tpu_custom_call.1} parent=1 // pred_region
      %75 = dma.done [#allocation5], 3840
    $region21: #{tpu_custom_call.1} parent=1 // pred_fallthru
      _
    // Predicated region
    $region22: #{tpu_custom_call.1} parent=1 // pred_check
      _
    $region23: #{tpu_custom_call.1} parent=1 // pred_check_branch
      %77 = sbr.rel (0) target = $region25
    $region24: #{tpu_custom_call.1} parent=1 // pred_region
      %78 = dma.done [#allocation8], 512
    $region25: #{tpu_custom_call.1} parent=1 // pred_fallthru
      _
    // Predicated region
    $region26: #{tpu_custom_call.1} parent=1 // pred_check
      _
    $region27: #{tpu_custom_call.1} parent=1 // pred_check_branch
      %80 = sbr.rel (0) target = $region29
    $region28: #{tpu_custom_call.1} parent=1 // pred_region
      %81 = dma.done [#allocation8], 2560
    $region29: #{tpu_custom_call.1} parent=1 // pred_fallthru
      _
    // Predicated region
    $region30: #{tpu_custom_call.1} parent=1 // pred_check
      _
    $region31: #{tpu_custom_call.1} parent=1 // pred_check_branch
      %83 = sbr.rel (0) target = $region33
    $region32: #{tpu_custom_call.1} parent=1 // pred_region
      %84 = dma.done [#allocation11], 128
    $region33: #{tpu_custom_call.1} parent=1 // pred_fallthru
      _
    %s85 = sadd.s32 0, 0
    %s86 = sadd.s32 0, 0
    %s87 = sadd.s32 0, 0
    %s88 = sadd.s32 0, 0
    %s89 = sld [smem:[#allocation3]]
    %s90 = sadd.s32 0, 0
    %s91 = smul.u32 %s90, 8
    %p92 = scmp.eq.s32.totalorder 0, 0
    // Predicated region
    $region34: #{tpu_custom_call.1} parent=1 // pred_check
      %p93 = pneg %p92
    $region35: #{tpu_custom_call.1} parent=1 // pred_check_branch
      %95 = sbr.rel (%p93) target = $region37
    $region36: #{tpu_custom_call.1} parent=1 // pred_region
      %96 = vst [vmem:[#allocation12] sm:$0xff] 0.0
      %97 = vst [vmem:[#allocation12 + $0x8] sm:$0xff] 0.0
      %98 = vst [vmem:[#allocation12 + $0x10] sm:$0xff] 0.0
      %99 = vst [vmem:[#allocation12 + $0x18] sm:$0xff] 0.0
      %100 = vst [vmem:[#allocation12 + $0x20] sm:$0xff] 0.0
    $region37: #{tpu_custom_call.1} parent=1 // pred_fallthru
      _
    %v101 = vlaneseq
    %v102 = vshrl.u32 %v101, 7
    %v103 = vlaneseq
    %v104 = vand.u32 %v103, 127
    %v105 = vstv %s91
    %v106 = vadd.s32 %v105, %v102
    %v107 = vmul.u32 %v106, 128
    %v108 = vadd.s32 %v107, %v104
    %v109 = vstv %s89
    %vm110 = vcmp.lt.s32.totalorder %v108, %v109
    %v111 = vsel %vm110, 1, 0
    %v112 = vcvt.s32.f32 %v111
    %v113 = vld [vmem:[#allocation10] sm:$0xff]
    %vm114 = vcmp.gt.f32.partialorder %v113, 0.5
    %v115 = vsub.f32 1.0, %v113
    %v116 = vmul.f32 %v115, %v112
    %s117 = sadd.s32 0, 80
    %s118 = scalar_lea.vmem [#allocation4], %s117
    %v119 = vld [vmem:[%s118] sm:$0xff]
    %v120 = vld [vmem:[#allocation9] sm:$0xff]
    %v121 = vsub.f32 %v119, %v120
    %v122 = vmul.f32 %v121, %v121
    %v123 = vadd.f32 %v122, 0.0
    %s124 = sadd.s32 0, 88
    %s125 = scalar_lea.vmem [#allocation4], %s124
    %v126 = vld [vmem:[%s125] sm:$0xff]
    %s127 = sadd.s32 0, 8
    %s128 = scalar_lea.vmem [#allocation9], %s127
    %v129 = vld [vmem:[%s128] sm:$0xff]
    %v130 = vsub.f32 %v126, %v129
    %v131 = vmul.f32 %v130, %v130
    %v132 = vadd.f32 %v123, %v131
    %s133 = sadd.s32 0, 96
    %s134 = scalar_lea.vmem [#allocation4], %s133
    %v135 = vld [vmem:[%s134] sm:$0xff]
    %s136 = sadd.s32 0, 16
    %s137 = scalar_lea.vmem [#allocation9], %s136
    %v138 = vld [vmem:[%s137] sm:$0xff]
    %v139 = vsub.f32 %v135, %v138
    %v140 = vmul.f32 %v139, %v139
    %v141 = vadd.f32 %v132, %v140
    %s142 = sadd.s32 0, 104
    %s143 = scalar_lea.vmem [#allocation4], %s142
    %v144 = vld [vmem:[%s143] sm:$0xff]
    %s145 = sadd.s32 0, 24
    %s146 = scalar_lea.vmem [#allocation9], %s145
    %v147 = vld [vmem:[%s146] sm:$0xff]
    %v148 = vsub.f32 %v144, %v147
    %v149 = vmul.f32 %v148, %v148
    %v150 = vadd.f32 %v141, %v149
    %s151 = sadd.s32 0, 112
    %s152 = scalar_lea.vmem [#allocation4], %s151
    %v153 = vld [vmem:[%s152] sm:$0xff]
    %s154 = sadd.s32 0, 32
    %s155 = scalar_lea.vmem [#allocation9], %s154
    %v156 = vld [vmem:[%s155] sm:$0xff]
    %v157 = vsub.f32 %v153, %v156
    %v158 = vmul.f32 %v157, %v157
    %v159 = vadd.f32 %v150, %v158
    %s160 = sadd.s32 0, 120
    %s161 = scalar_lea.vmem [#allocation4], %s160
    %v162 = vld [vmem:[%s161] sm:$0xff]
    %s163 = sadd.s32 0, 40
    %s164 = scalar_lea.vmem [#allocation9], %s163
    %v165 = vld [vmem:[%s164] sm:$0xff]
    %v166 = vsub.f32 %v162, %v165
    %v167 = vmul.f32 %v166, %v166
    %v168 = vadd.f32 %v159, %v167
    %s169 = sadd.s32 0, 128
    %s170 = scalar_lea.vmem [#allocation4], %s169
    %v171 = vld [vmem:[%s170] sm:$0xff]
    %s172 = sadd.s32 0, 48
    %s173 = scalar_lea.vmem [#allocation9], %s172
    %v174 = vld [vmem:[%s173] sm:$0xff]
    %v175 = vsub.f32 %v171, %v174
    %v176 = vmul.f32 %v175, %v175
    %v177 = vadd.f32 %v168, %v176
    %s178 = sadd.s32 0, 136
    %s179 = scalar_lea.vmem [#allocation4], %s178
    %v180 = vld [vmem:[%s179] sm:$0xff]
    %s181 = sadd.s32 0, 56
    %s182 = scalar_lea.vmem [#allocation9], %s181
    %v183 = vld [vmem:[%s182] sm:$0xff]
    %v184 = vsub.f32 %v180, %v183
    %v185 = vmul.f32 %v184, %v184
    %v186 = vadd.f32 %v177, %v185
    %s187 = sadd.s32 0, 144
    %s188 = scalar_lea.vmem [#allocation4], %s187
    %v189 = vld [vmem:[%s188] sm:$0xff]
    %s190 = sadd.s32 0, 64
    %s191 = scalar_lea.vmem [#allocation9], %s190
    %v192 = vld [vmem:[%s191] sm:$0xff]
    %v193 = vsub.f32 %v189, %v192
    %v194 = vmul.f32 %v193, %v193
    %v195 = vadd.f32 %v186, %v194
    %s196 = sadd.s32 0, 152
    %s197 = scalar_lea.vmem [#allocation4], %s196
    %v198 = vld [vmem:[%s197] sm:$0xff]
    %s199 = sadd.s32 0, 72
    %s200 = scalar_lea.vmem [#allocation9], %s199
    %v201 = vld [vmem:[%s200] sm:$0xff]
    %v202 = vsub.f32 %v198, %v201
    %v203 = vmul.f32 %v202, %v202
    %v204 = vadd.f32 %v195, %v203
    %s205 = sadd.s32 0, 160
    %s206 = scalar_lea.vmem [#allocation4], %s205
    %v207 = vld [vmem:[%s206] sm:$0xff]
    %s208 = scalar_lea.vmem [#allocation9], %s117
    %v209 = vld [vmem:[%s208] sm:$0xff]
    %v210 = vsub.f32 %v207, %v209
    %v211 = vmul.f32 %v210, %v210
    %v212 = vadd.f32 %v204, %v211
    %s213 = sadd.s32 0, 168
    %s214 = scalar_lea.vmem [#allocation4], %s213
    %v215 = vld [vmem:[%s214] sm:$0xff]
    %s216 = scalar_lea.vmem [#allocation9], %s124
    %v217 = vld [vmem:[%s216] sm:$0xff]
    %v218 = vsub.f32 %v215, %v217
    %v219 = vmul.f32 %v218, %v218
    %v220 = vadd.f32 %v212, %v219
    %s221 = sadd.s32 0, 176
    %s222 = scalar_lea.vmem [#allocation4], %s221
    %v223 = vld [vmem:[%s222] sm:$0xff]
    %s224 = scalar_lea.vmem [#allocation9], %s133
    %v225 = vld [vmem:[%s224] sm:$0xff]
    %v226 = vsub.f32 %v223, %v225
    %v227 = vmul.f32 %v226, %v226
    %v228 = vadd.f32 %v220, %v227
    %s229 = sadd.s32 0, 184
    %s230 = scalar_lea.vmem [#allocation4], %s229
    %v231 = vld [vmem:[%s230] sm:$0xff]
    %s232 = scalar_lea.vmem [#allocation9], %s142
    %v233 = vld [vmem:[%s232] sm:$0xff]
    %v234 = vsub.f32 %v231, %v233
    %v235 = vmul.f32 %v234, %v234
    %v236 = vadd.f32 %v228, %v235
    %s237 = sadd.s32 0, 192
    %s238 = scalar_lea.vmem [#allocation4], %s237
    %v239 = vld [vmem:[%s238] sm:$0xff]
    %s240 = scalar_lea.vmem [#allocation9], %s151
    %v241 = vld [vmem:[%s240] sm:$0xff]
    %v242 = vsub.f32 %v239, %v241
    %v243 = vmul.f32 %v242, %v242
    %v244 = vadd.f32 %v236, %v243
    %s245 = sadd.s32 0, 200
    %s246 = scalar_lea.vmem [#allocation4], %s245
    %v247 = vld [vmem:[%s246] sm:$0xff]
    %s248 = scalar_lea.vmem [#allocation9], %s160
    %v249 = vld [vmem:[%s248] sm:$0xff]
    %v250 = vsub.f32 %v247, %v249
    %v251 = vmul.f32 %v250, %v250
    %v252 = vadd.f32 %v244, %v251
    %s253 = sadd.s32 0, 208
    %s254 = scalar_lea.vmem [#allocation4], %s253
    %v255 = vld [vmem:[%s254] sm:$0xff]
    %s256 = scalar_lea.vmem [#allocation9], %s169
    %v257 = vld [vmem:[%s256] sm:$0xff]
    %v258 = vsub.f32 %v255, %v257
    %v259 = vmul.f32 %v258, %v258
    %v260 = vadd.f32 %v252, %v259
    %s261 = sadd.s32 0, 216
    %s262 = scalar_lea.vmem [#allocation4], %s261
    %v263 = vld [vmem:[%s262] sm:$0xff]
    %s264 = scalar_lea.vmem [#allocation9], %s178
    %v265 = vld [vmem:[%s264] sm:$0xff]
    %v266 = vsub.f32 %v263, %v265
    %v267 = vmul.f32 %v266, %v266
    %v268 = vadd.f32 %v260, %v267
    %s269 = sadd.s32 0, 224
    %s270 = scalar_lea.vmem [#allocation4], %s269
    %v271 = vld [vmem:[%s270] sm:$0xff]
    %s272 = scalar_lea.vmem [#allocation9], %s187
    %v273 = vld [vmem:[%s272] sm:$0xff]
    %v274 = vsub.f32 %v271, %v273
    %v275 = vmul.f32 %v274, %v274
    %v276 = vadd.f32 %v268, %v275
    %s277 = sadd.s32 0, 232
    %s278 = scalar_lea.vmem [#allocation4], %s277
    %v279 = vld [vmem:[%s278] sm:$0xff]
    %s280 = scalar_lea.vmem [#allocation9], %s196
    %v281 = vld [vmem:[%s280] sm:$0xff]
    %v282 = vsub.f32 %v279, %v281
    %v283 = vmul.f32 %v282, %v282
    %v284 = vadd.f32 %v276, %v283
    %v285 = vsel %vm114, %v284, 0.0
    %v286 = vadd.f32 %v285, 0.0
    %v287 = vld [vmem:[#allocation7] sm:$0xff]
    %s288 = scalar_lea.vmem [#allocation7], %s127
    %v289 = vld [vmem:[%s288] sm:$0xff]
    %s290 = scalar_lea.vmem [#allocation7], %s136
    %v291 = vld [vmem:[%s290] sm:$0xff]
    %s292 = scalar_lea.vmem [#allocation7], %s145
    %v293 = vld [vmem:[%s292] sm:$0xff]
    %v294 = vmul.f32 %v287, 0.125
    %v295 = vmul.f32 %v291, 0.5
    %v296 = vsub.f32 %v294, %v295
    %v297 = vadd.f32 %v294, %v295
    %v298 = vmul.f32 %v289, 0.125
    %v299 = vmul.f32 %v293, 0.5
    %v300 = vsub.f32 %v298, %v299
    %v301 = vadd.f32 %v298, %v299
    %v302 = vmul.f32 %v291, %v293
    %v303 = vld [vmem:[#allocation4] sm:$0xff]
    %s304 = scalar_lea.vmem [#allocation4], %s127
    %v305 = vld [vmem:[%s304] sm:$0xff]
    %s306 = scalar_lea.vmem [#allocation4], %s136
    %v307 = vld [vmem:[%s306] sm:$0xff]
    %s308 = scalar_lea.vmem [#allocation4], %s145
    %v309 = vld [vmem:[%s308] sm:$0xff]
    %s310 = scalar_lea.vmem [#allocation4], %s154
    %v311 = vld [vmem:[%s310] sm:$0xff]
    %v312 = vmul.f32 %v311, %v311
    %v313 = vmul.f32 %v303, 0.125
    %v314 = vmul.f32 %v307, 0.5
    %v315 = vsub.f32 %v313, %v314
    %v316 = vadd.f32 %v313, %v314
    %v317 = vmul.f32 %v305, 0.125
    %v318 = vmul.f32 %v309, 0.5
    %v319 = vsub.f32 %v317, %v318
    %v320 = vadd.f32 %v317, %v318
    %v321 = vmin.f32 %v316, %v297
    %v322 = vmax.f32 %v315, %v296
    %v323 = vsub.f32 %v321, %v322
    %v324 = vmax.f32 %v323, 0.0
    %v325 = vmin.f32 %v320, %v301
    %v326 = vmax.f32 %v319, %v300
    %v327 = vsub.f32 %v325, %v326
    %v328 = vmax.f32 %v327, 0.0
    %v329 = vmul.f32 %v324, %v328
    %v330 = vmul.f32 %v307, %v309
    %v331 = vadd.f32 %v330, %v302
    %v332 = vsub.f32 %v331, %v329
    %s333 = scalar_lea.vmem [#allocation4], %s163
    %v334 = vld [vmem:[%s333] sm:$0xff]
    %s335 = scalar_lea.vmem [#allocation4], %s172
    %v336 = vld [vmem:[%s335] sm:$0xff]
    %s337 = scalar_lea.vmem [#allocation4], %s181
    %v338 = vld [vmem:[%s337] sm:$0xff]
    %s339 = scalar_lea.vmem [#allocation4], %s190
    %v340 = vld [vmem:[%s339] sm:$0xff]
    %s341 = scalar_lea.vmem [#allocation4], %s199
    %v342 = vld [vmem:[%s341] sm:$0xff]
    %v343 = vmul.f32 %v342, %v342
    %v344 = vadd.f32 %v312, %v343
    %v345 = vmul.f32 %v334, 0.125
    %v346 = vmul.f32 %v338, 0.5
    %v347 = vsub.f32 %v345, %v346
    %v348 = vadd.f32 %v345, %v346
    %v349 = vmul.f32 %v336, 0.125
    %v350 = vmul.f32 %v340, 0.5
    %v351 = vsub.f32 %v349, %v350
    %v352 = vadd.f32 %v349, %v350
    %v353 = vmin.f32 %v348, %v297
    %v354 = vmax.f32 %v347, %v296
    %v355 = vsub.f32 %v353, %v354
    %v356 = vmax.f32 %v355, 0.0
    %v357 = vmin.f32 %v352, %v301
    %v358 = vmax.f32 %v351, %v300
    %v359 = vsub.f32 %v357, %v358
    %v360 = vmax.f32 %v359, 0.0
    %v361 = vmul.f32 %v356, %v360
    %v362 = vmul.f32 %v338, %v340
    %v363 = vadd.f32 %v362, %v302
    %v364 = vsub.f32 %v363, %v361
    %v365 = vmul.f32 %v361, %v332
    %v366 = vmul.f32 %v329, %v364
    %vm367 = vcmp.gt.f32.partialorder %v365, %v366
    %v368 = vsel %vm367, %v361, %v329
    %v369 = vsel %vm367, %v364, %v332
    %v370 = vsel %vm367, %v334, %v303
    %v371 = vsel %vm367, %v336, %v305
    %v372 = vsel %vm367, %v338, %v307
    %v373 = vsel %vm367, %v340, %v309
    %v374 = vsel %vm367, %v342, %v311
    %v375 = vmul.f32 %v116, %v344
    %v376 = vadd.f32 %v375, 0.0
    %v377 = vadd.f32 %v116, 0.0
    %vm378 = vcmp.gt.f32.partialorder %v369, 0.0
    %v379 = vrcp.pop %v369
    %v380 = vmul.f32 %v368, %v379
    %v381 = vsel %vm378, %v380, 0.0
    %v382 = vsub.f32 %v370, %v287
    %v383 = vmul.f32 %v382, %v382
    %v384 = vsub.f32 %v371, %v289
    %v385 = vmul.f32 %v384, %v384
    %v386 = vadd.f32 %v383, %v385
    %v387 = vrsqrt.pop %v372
    %v388 = vmul.f32 %v372, %v387
    %vm389 = vcmp.eq.f32.partialorder %v372, inf
    %v390 = vsel %vm389, %v372, %v388
    %vm391 = vcmp.eq.f32.partialorder %v372, 0.0
    %v392 = vand.u32 %v372, 2147483648
    %v393 = vsel %vm391, %v392, %v390
    %v394 = vrsqrt.pop %v291
    %v395 = vmul.f32 %v291, %v394
    %vm396 = vcmp.eq.f32.partialorder %v291, inf
    %v397 = vsel %vm396, %v291, %v395
    %vm398 = vcmp.eq.f32.partialorder %v291, 0.0
    %v399 = vand.u32 %v291, 2147483648
    %v400 = vsel %vm398, %v399, %v397
    %v401 = vsub.f32 %v393, %v400
    %v402 = vmul.f32 %v401, %v401
    %v403 = vadd.f32 %v386, %v402
    %v404 = vrsqrt.pop %v373
    %v405 = vmul.f32 %v373, %v404
    %vm406 = vcmp.eq.f32.partialorder %v373, inf
    %v407 = vsel %vm406, %v373, %v405
    %vm408 = vcmp.eq.f32.partialorder %v373, 0.0
    %v409 = vand.u32 %v373, 2147483648
    %v410 = vsel %vm408, %v409, %v407
    %v411 = vrsqrt.pop %v293
    %v412 = vmul.f32 %v293, %v411
    %vm413 = vcmp.eq.f32.partialorder %v293, inf
    %v414 = vsel %vm413, %v293, %v412
    %vm415 = vcmp.eq.f32.partialorder %v293, 0.0
    %v416 = vand.u32 %v293, 2147483648
    %v417 = vsel %vm415, %v416, %v414
    %v418 = vsub.f32 %v410, %v417
    %v419 = vmul.f32 %v418, %v418
    %v420 = vadd.f32 %v403, %v419
    %v421 = vsel %vm114, %v420, 0.0
    %v422 = vadd.f32 %v421, 0.0
    %v423 = vsub.f32 %v374, %v381
    %v424 = vmul.f32 %v423, %v423
    %v425 = vsel %vm114, %v424, 0.0
    %v426 = vadd.f32 %v425, 0.0
    %v427 = vld [vmem:[#allocation12] sm:$0xff]
    %v428 = vadd.f32 %v427, %v286
    %429 = vst [vmem:[#allocation12] sm:$0xff] %v428
    %v430 = vld [vmem:[#allocation12 + $0x8] sm:$0xff]
    %v431 = vadd.f32 %v430, %v376
    %432 = vst [vmem:[#allocation12 + $0x8] sm:$0xff] %v431
    %v433 = vld [vmem:[#allocation12 + $0x10] sm:$0xff]
    %v434 = vadd.f32 %v433, %v377
    %435 = vst [vmem:[#allocation12 + $0x10] sm:$0xff] %v434
    %v436 = vld [vmem:[#allocation12 + $0x18] sm:$0xff]
    %v437 = vadd.f32 %v436, %v422
    %438 = vst [vmem:[#allocation12 + $0x18] sm:$0xff] %v437
    %v439 = vld [vmem:[#allocation12 + $0x20] sm:$0xff]
    %v440 = vadd.f32 %v439, %v426
    %441 = vst [vmem:[#allocation12 + $0x20] sm:$0xff] %v440
    // Predicated region
    $region38: #{tpu_custom_call.1} parent=1 // pred_check
      _
    $region39: #{tpu_custom_call.1} parent=1 // pred_check_branch
      %443 = sbr.rel (0) target = $region41
    $region40: #{tpu_custom_call.1} parent=1 // pred_region
      %s445 = ssub.s32 640, 640
      %446 = vsyncadd [#allocation6], %s445
      %s447 = sshll.u32 [#allocation12], 4
      %s448 = int_to_ptr.vmem [resolvable:$true] %s447
      %453 = dma.vmem_to_hbm [thread:$0]  %s448, 640, %s5, [#allocation6], 128, 128, 8
    $region41: #{tpu_custom_call.1} parent=1 // pred_fallthru
      _
    // Predicated region
    $region42: #{tpu_custom_call.1} parent=1 // pred_check
      _
    $region43: #{tpu_custom_call.1} parent=1 // pred_check_branch
      %455 = sbr.rel (0) target = $region45
    $region44: #{tpu_custom_call.1} parent=1 // pred_region
      %456 = dma.done [#allocation6], 640
    $region45: #{tpu_custom_call.1} parent=1 // pred_fallthru
      _
    %457 = vsyncpa [#allocation5], 1
    %458 = vsyncpa [#allocation8], 1
    %459 = vsyncpa [#allocation11], 1
    %460 = vsyncpa [#allocation6], 1

</llo_original>
